<compile_context>
chip_gen: v6e
topology: v6e:2x2x1
jax: 0.10.0
libtpu: 0.0.40
codegen_flags: <defaults>
</compile_context>

<pallas_src>
import jax
import jax.numpy as jnp
from jax.experimental import pallas as pl
from jax.experimental.pallas import tpu as pltpu

_LN_EPS = 1e-5


def _round_down(v, m):
    return (v // m) * m


# --------------------------------------------------------------------------- #
# Kernel 1: gamma/beta = SiLU(cond) @ W + b   (column-tiled over the 2*D axis) #
# --------------------------------------------------------------------------- #
def _cond_kernel(cond_ref, w_ref, b_ref, gb_ref):
    # cond_ref: (B, DC) resident; w_ref: (DC, TC) column tile; b_ref: (1, TC); gb_ref: (B, TC)
    c = cond_ref[...].astype(jnp.float32)
    c_act = c * jax.nn.sigmoid(c)                       # SiLU in f32
    c_act = c_act.astype(w_ref.dtype)                   # matmul in weight storage dtype (MXU-native)
    gb = jnp.dot(c_act, w_ref[...], preferred_element_type=jnp.float32)   # (B, TC) f32 acc
    gb_ref[...] = gb + b_ref[...].astype(jnp.float32)


# --------------------------------------------------------------------------- #
# Kernel 2: out = LayerNorm(x) * gamma + beta on one (1, TN, D) seq tile       #
# --------------------------------------------------------------------------- #
def _ln_modulate_kernel(x_ref, gb_ref, o_ref):
    x = x_ref[...].astype(jnp.float32)                  # (1, TN, D)
    inv_d = jnp.float32(1.0 / x.shape[-1])

    # Two-pass mean / variance (numerically stable); tile is resident so this is free
    # at the HBM roofline.
    mean = jnp.sum(x, axis=-1, keepdims=True) * inv_d
    xc = x - mean
    var = jnp.sum(xc * xc, axis=-1, keepdims=True) * inv_d
    xn = xc * jax.lax.rsqrt(var + _LN_EPS)

    gb = gb_ref[...]                                    # (1, 2, D) f32, resident per batch
    gamma = gb[:, 0:1, :]                               # (1, 1, D)
    beta = gb[:, 1:2, :]                                # (1, 1, D)
    o_ref[...] = (xn * gamma + beta).astype(o_ref.dtype)


# --------------------------------------------------------------------------- #
# Wrapper                                                                      #
# --------------------------------------------------------------------------- #
def adaptive_layer_norm(x, cond, w, b, *, block_n=None):
    """x: (B, N, D); cond: (B, DC); w: (DC, 2*D) (transposed so gb = SiLU(cond) @ w); b: (2*D,)."""
    B, N, D = x.shape
    DC = cond.shape[-1]
    assert w.shape == (DC, 2 * D) and b.shape == (2 * D,)
    two_d = 2 * D

    # ---------------- conditioning kernel: column-tiled weight ----------------
    w_item = w.dtype.itemsize
    # ~2 MiB of weight per column tile, lane-aligned (multiple of 128) unless it covers 2*D.
    tc = max(128, _round_down(max(128, (2 << 20) // max(1, DC * w_item)), 128))
    if tc >= two_d:
        tc = two_d
    cond_grid = (pl.cdiv(two_d, tc),)

    cond_vmem = (2 * B * DC * cond.dtype.itemsize       # resident cond (double-buffer slack)
                 + 2 * DC * tc * w_item                  # double-buffered weight tile
                 + 2 * tc * b.dtype.itemsize             # bias tile
                 + 2 * B * tc * 4                        # output tile (f32)
                 + (2 << 20))                            # slack
    cond_vmem = int(min(max(cond_vmem, 8 << 20), 48 << 20))

    gb = pl.pallas_call(
        _cond_kernel,
        out_shape=jax.ShapeDtypeStruct((B, two_d), jnp.float32),
        grid_spec=pltpu.PrefetchScalarGridSpec(
            num_scalar_prefetch=0,
            grid=cond_grid,
            in_specs=[
                pl.BlockSpec((B, DC), lambda j: (0, 0)),     # cond: whole, resident
                pl.BlockSpec((DC, tc), lambda j: (0, j)),    # weight column tile
                pl.BlockSpec((1, tc), lambda j: (0, j)),     # bias column tile
            ],
            out_specs=pl.BlockSpec((B, tc), lambda j: (0, j)),
        ),
        compiler_params=pltpu.CompilerParams(
            dimension_semantics=("parallel",),
            vmem_limit_bytes=cond_vmem,
        ),
    )(cond, w, b.reshape(1, two_d))

    # (B, 2D) -> (B, 2, D): layout-free when D % 128 == 0; tiny copy otherwise.
    gb = gb.reshape(B, 2, D)

    # ---------------- main kernel: LayerNorm + modulate ----------------
    itemsize = x.dtype.itemsize
    sublane = max(8, 32 // itemsize)                     # 8 (f32) / 16 (bf16) sublane packing

    # Derive tile rows from a VMEM byte budget: 2x in + 2x out buffers in storage dtype
    # plus ~3 f32 temporaries (upcast, centered, normalized) per row.
    per_row = D * (4 * itemsize + 3 * 4)
    tn = (30 << 20) // per_row                           # keep per-step footprint ~<= 30 MiB
    tn = min(tn, max(sublane, (4 << 20) // (D * itemsize)))   # don't overshoot ~4 MiB x-block
    if block_n is not None:
        tn = min(tn, max(sublane, _round_down(block_n, sublane)))
    tn = max(tn, sublane)
    if tn >= N:
        tn = N
    else:
        tn = max(sublane, _round_down(tn, sublane))      # (8,128) divisibility unless tn == N
        if tn >= N:
            tn = N
    # v7x shards "parallel" axes over 2 TensorCores; make sure there are >= 2 grid steps.
    if B * pl.cdiv(N, tn) < 2 and N > sublane:
        tn = max(sublane, _round_down(pl.cdiv(N, 2), sublane))

    grid = (B, pl.cdiv(N, tn))

    bx = tn * D * itemsize                               # one x/out block in storage dtype
    bf = tn * D * 4                                      # one f32 temp tile
    needed = 4 * bx + 3 * bf + 4 * two_d * 4 + (2 << 20)
    vmem_limit = int(min(max(needed, 16 << 20), 48 << 20))   # <=48 MiB: headroom on v7x

    cost = pl.CostEstimate(
        flops=int(8 * B * N * D),
        transcendentals=int(B * N),                      # one rsqrt per row
        bytes_accessed=int(2 * B * N * D * itemsize + B * two_d * 4),
    )

    return pl.pallas_call(
        _ln_modulate_kernel,
        out_shape=jax.ShapeDtypeStruct((B, N, D), x.dtype),
        grid_spec=pltpu.PrefetchScalarGridSpec(
            num_scalar_prefetch=0,
            grid=grid,
            in_specs=[
                pl.BlockSpec((1, tn, D), lambda bi, si: (bi, si, 0)),
                pl.BlockSpec((1, 2, D), lambda bi, si: (bi, 0, 0)),   # gamma+beta, one stream
            ],
            out_specs=pl.BlockSpec((1, tn, D), lambda bi, si: (bi, si, 0)),
        ),
        compiler_params=pltpu.CompilerParams(
            dimension_semantics=("parallel", "parallel"),
            vmem_limit_bytes=vmem_limit,
        ),
        cost_estimate=cost,
    )(x, gb)


# --------------------------------------------------------------------------- #
# Pure-JAX reference mirroring the PyTorch forward                             #
# --------------------------------------------------------------------------- #
def adaptive_layer_norm_ref(x, cond, w, b):
    xf = x.astype(jnp.float32)
    mean = jnp.mean(xf, axis=-1, keepdims=True)
    var = jnp.mean((xf - mean) ** 2, axis=-1, keepdims=True)
    xn = (xf - mean) / jnp.sqrt(var + _LN_EPS)
    c = cond.astype(jnp.float32)[:, None, :]
    c = c * jax.nn.sigmoid(c)
    gb = c @ w.astype(jnp.float32) + b.astype(jnp.float32)
    D = x.shape[-1]
    gamma, beta = gb[..., :D], gb[..., D:]
    return (xn * gamma + beta).astype(x.dtype)


if __name__ == "__main__":
    def _make_inputs(key, B, N, D, DC):
        kx, kc, kw = jax.random.split(key, 3)
        x = jax.random.normal(kx, (B, N, D), dtype=jnp.float32)
        cond = jax.random.normal(kc, (B, DC), dtype=jnp.float32)
        # Module zero-inits the weight; use a small nonzero weight so the cond matmul
        # path is exercised.  Bias follows module init: ones for gamma, zeros for beta.
        w = 0.02 * jax.random.normal(kw, (DC, 2 * D), dtype=jnp.float32)
        b = jnp.concatenate(
            [jnp.ones((D,), jnp.float32), jnp.zeros((D,), jnp.float32)])
        return x, cond, w, b

    # Test 1: small shapes consistent with the module (batch=2, seq=8, dim=32, dim_cond=16).
    B, N, DIM, DIM_COND = 2, 8, 32, 16
    x, cond, w, b = _make_inputs(jax.random.PRNGKey(0), B, N, DIM, DIM_COND)
    out = jax.block_until_ready(adaptive_layer_norm(x, cond, w, b))
    ref = adaptive_layer_norm_ref(x, cond, w, b)
    assert out.shape == (B, N, DIM)
    assert jnp.allclose(out, ref, atol=1e-5, rtol=1e-5), "mismatch vs reference (test 1)"

    # Test 2: exercise the (batch, seq)-tiled path with multiple seq tiles and a
    # full-lane (D=128) block; block_n forces 4 seq tiles per batch element.
    B2, N2, DIM2, DIM_COND2 = 2, 64, 128, 16
    x2, cond2, w2, b2 = _make_inputs(jax.random.PRNGKey(1), B2, N2, DIM2, DIM_COND2)
    out2 = jax.block_until_ready(
        adaptive_layer_norm(x2, cond2, w2, b2, block_n=16))
    ref2 = adaptive_layer_norm_ref(x2, cond2, w2, b2)
    assert out2.shape == (B2, N2, DIM2)
    assert jnp.allclose(out2, ref2, atol=1e-5, rtol=1e-5), "mismatch vs reference (test 2)"

    print("KERNEL_OK")
</pallas_src>

<mosaic_0001>
module attributes {stable_mosaic.version = 11 : i64} {
  func.func @_cond_kernel(%arg0: i32, %arg1: memref<2x16xf32, #tpu.memory_space<vmem>>, %arg2: memref<16x64xf32, #tpu.memory_space<vmem>>, %arg3: memref<1x64xf32, #tpu.memory_space<vmem>>, %arg4: memref<2x64xf32, #tpu.memory_space<vmem>>) attributes {dimension_semantics = [#tpu.dimension_semantics<parallel>], iteration_bounds = array<i64: 1>, scalar_prefetch = 0 : i64, scratch_operands = 0 : i64, tpu.core_type = #tpu.core_type<tc>, window_params = [{pipeline_mode = #tpu.pipeline_mode<synchronous>, transform_indices = @transform_0, window_bounds = array<i64: 2, 16>}, {transform_indices = @transform_1, window_bounds = array<i64: 16, 64>}, {transform_indices = @transform_2, window_bounds = array<i64: 1, 64>}, {transform_indices = @transform_3, window_bounds = array<i64: 2, 64>}]} {
    %c0 = arith.constant 0 : index
    %c0_0 = arith.constant 0 : index
    %0 = vector.load %arg1[%c0, %c0_0] : memref<2x16xf32, #tpu.memory_space<vmem>>, vector<2x16xf32>
    %1 = arith.negf %0 : vector<2x16xf32>
    %2 = math.exp %1 : vector<2x16xf32>
    %cst = arith.constant 1.000000e+00 : f32
    %3 = vector.broadcast %cst : f32 to vector<2x16xf32>
    %4 = arith.addf %3, %2 : vector<2x16xf32>
    %5 = arith.divf %3, %4 : vector<2x16xf32>
    %6 = arith.mulf %0, %5 : vector<2x16xf32>
    %c0_1 = arith.constant 0 : index
    %c0_2 = arith.constant 0 : index
    %7 = vector.load %arg2[%c0_1, %c0_2] : memref<16x64xf32, #tpu.memory_space<vmem>>, vector<16x64xf32>
    %cst_3 = arith.constant dense<0.000000e+00> : vector<2x64xf32>
    %8 = tpu.matmul %6, %7, %cst_3 {dimension_numbers = #tpu.dot_dimension_numbers<[1], [0], [0], [1], [0, 0, 1, 1], [], []>} : vector<2x16xf32>, vector<16x64xf32>, vector<2x64xf32> -> vector<2x64xf32>
    %c0_4 = arith.constant 0 : index
    %c0_5 = arith.constant 0 : index
    %9 = vector.load %arg3[%c0_4, %c0_5] : memref<1x64xf32, #tpu.memory_space<vmem>>, vector<1x64xf32>
    %10 = vector.broadcast %9 : vector<1x64xf32> to vector<2x64xf32>
    %11 = arith.addf %8, %10 : vector<2x64xf32>
    %c0_6 = arith.constant 0 : index
    %c0_7 = arith.constant 0 : index
    %12 = vector.load %arg4[%c0_6, %c0_7] : memref<2x64xf32, #tpu.memory_space<vmem>>, vector<2x64xf32>
    tpu.vector_store %arg4[%c0_6, %c0_7], %11 {strides = array<i32>} : memref<2x64xf32, #tpu.memory_space<vmem>>, vector<2x64xf32>,
    return
  }
  func.func @transform_0(%arg0: i32) -> (i32, i32) {
    %c0_i32 = arith.constant 0 : i32
    %c0_i32_0 = arith.constant 0 : i32
    %c0_i32_1 = arith.constant 0 : i32
    return %c0_i32, %c0_i32_0 : i32, i32
  }
  func.func @transform_1(%arg0: i32) -> (i32, i32) {
    %c0_i32 = arith.constant 0 : i32
    %c0_i32_0 = arith.constant 0 : i32
    return %c0_i32, %arg0 : i32, i32
  }
  func.func @transform_2(%arg0: i32) -> (i32, i32) {
    %c0_i32 = arith.constant 0 : i32
    %c0_i32_0 = arith.constant 0 : i32
    return %c0_i32, %arg0 : i32, i32
  }
  func.func @transform_3(%arg0: i32) -> (i32, i32) {
    %c0_i32 = arith.constant 0 : i32
    %c0_i32_0 = arith.constant 0 : i32
    return %c0_i32, %arg0 : i32, i32
  }
}

</mosaic_0001>

<llo_original>
// kernel: tpu_custom_call.1
$region0: #{tpu_custom_call.1}
  #allocation0 [shape = 'u32[]', space=smem, size = 0x4, offset = 0x4, fixed_abs, tag = 'smem constant byte address 0x4 - core index']
  #allocation1 [shape = 'u32[144,128]{1,0:T(1,128)}', space=vmem, size = 0x12000, scoped, tag = 'internal scratch']
  %s0 = inlined_call_operand.hbm [shape: f32[2,16], index: 0, kind: input, shape index: {}]
  %s1 = inlined_call_operand.hbm [shape: f32[16,64], index: 1, kind: input, shape index: {}]
  %s2 = inlined_call_operand.vmem [shape: f32[1,64], index: 2, kind: input, shape index: {}]
  %s3 = inlined_call_operand.hbm [shape: f32[2,64], index: 3, kind: output, shape index: {}]
  %s4 = sld [smem:[#allocation0]]
  $region30: #{tpu_custom_call.1} parent=0
    _
  %s6 = ssub.s32 1, %s4
  %s7 = scalar_select 0, %s6, %s4
  $region1: #{tpu_custom_call.1} parent=0
    #allocation2 [shape = 'u8[1024]{0}', space=vmem, size = 0x400, scoped, tag = 'input window, operand 0, single buffered']
    #allocation3 [shape = 's32[1]{0}', space=sflag, size = 0x4, scoped, tag = 'scoped memory for tpu_custom_call.1']
    #allocation4 [shape = 's32[1]{0}', space=sflag, size = 0x4, scoped, tag = 'scoped memory for tpu_custom_call.1']
    #allocation5 [shape = 'u8[8192]{0}', space=vmem, size = 0x2000, scoped, tag = 'input window, operand 1, single buffered']
    #allocation6 [shape = 's32[1]{0}', space=sflag, size = 0x4, scoped, tag = 'scoped memory for tpu_custom_call.1']
    #allocation7 [shape = 'u8[1024]{0}', space=vmem, size = 0x400, scoped, tag = 'output window, operand 0, single buffered']
    %8 = vsyncpa [#allocation3], 0
    %9 = vsyncpa [#allocation6], 0
    %10 = vsyncpa [#allocation4], 0
    // Predicated region
    $region2: #{tpu_custom_call.1} parent=1 // pred_check
      _
    $region3: #{tpu_custom_call.1} parent=1 // pred_check_branch
      %12 = sbr.rel (0) target = $region5
    $region4: #{tpu_custom_call.1} parent=1 // pred_region
      %s14 = ssub.s32 32, 32
      %15 = vsyncadd [#allocation3], %s14
      %s17 = sshll.u32 [#allocation2], 4
      %s18 = int_to_ptr.vmem [resolvable:$true] %s17
      %20 = dma.hbm_to_vmem [thread:$0]  %s0, 32, %s18, [#allocation3]
    $region5: #{tpu_custom_call.1} parent=1 // pred_fallthru
      _
    // Predicated region
    $region6: #{tpu_custom_call.1} parent=1 // pred_check
      _
    $region7: #{tpu_custom_call.1} parent=1 // pred_check_branch
      %22 = sbr.rel (0) target = $region9
    $region8: #{tpu_custom_call.1} parent=1 // pred_region
      %s24 = ssub.s32 256, 256
      %25 = vsyncadd [#allocation6], %s24
      %s26 = sshll.u32 [#allocation5], 4
      %s27 = int_to_ptr.vmem [resolvable:$true] %s26
      %32 = dma.hbm_to_vmem [thread:$0]  %s1, 256, %s27, [#allocation6], 128, 128, 8
    $region9: #{tpu_custom_call.1} parent=1 // pred_fallthru
      _
    // Predicated region
    $region10: #{tpu_custom_call.1} parent=1 // pred_check
      _
    $region11: #{tpu_custom_call.1} parent=1 // pred_check_branch
      %34 = sbr.rel (0) target = $region13
    $region12: #{tpu_custom_call.1} parent=1 // pred_region
      _
    $region13: #{tpu_custom_call.1} parent=1 // pred_fallthru
      _
    // Predicated region
    $region14: #{tpu_custom_call.1} parent=1 // pred_check
      _
    $region15: #{tpu_custom_call.1} parent=1 // pred_check_branch
      %36 = sbr.rel (0) target = $region17
    $region16: #{tpu_custom_call.1} parent=1 // pred_region
      %37 = dma.done [#allocation3], 32
    $region17: #{tpu_custom_call.1} parent=1 // pred_fallthru
      _
    // Predicated region
    $region18: #{tpu_custom_call.1} parent=1 // pred_check
      _
    $region19: #{tpu_custom_call.1} parent=1 // pred_check_branch
      %39 = sbr.rel (0) target = $region21
    $region20: #{tpu_custom_call.1} parent=1 // pred_region
      %40 = dma.done [#allocation6], 256
    $region21: #{tpu_custom_call.1} parent=1 // pred_fallthru
      _
    %v41 = vld [vmem:[#allocation2] sm:$0x3]
    %v42 = vxor.u32 %v41, 2147483648
    %v43 = vmul.f32 %v42, 1.442695
    %v44 = vpow.pop %v43
    %v45 = vadd.f32 %v44, 1.0
    %v46 = vrcp.pop %v45
    %v47 = vmul.f32 1.0, %v46
    %v48 = vmul.f32 %v41, %v47
    %v49 = vld [vmem:[#allocation5] sm:$0xff]
    %v50 = vld [vmem:[#allocation5 + $0x8] sm:$0xff]
    %v51 = vld [vmem:[%s2] sm:$0x1]
    %v53 = vlaneseq
    %v54 = vshrl.u32 %v53, 7
    %v55 = vsub.s32 0, %v54
    %v56 = vrot.slane %v51, %v55
    %vm58 = vcmask 130048
    %v60 = vsel %vm58, %v48, 0
    %62 = vmatprep.subr.mxu0 0.0
    %63 = vmatpush1.msra.mxu0 0.0
    %64 = vmatprep.subr.mxu0 0.0
    %65 = vmatpush1.msra.mxu0 0.0
    %66 = vmatprep.subr.mxu0 0.0
    %67 = vmatpush1.msra.mxu0 0.0
    %68 = vmatprep.subr.mxu0 0.0
    %69 = vmatpush1.msra.mxu0 0.0
    %70 = vmatprep.subr.mxu0 0.0
    %71 = vmatpush1.msra.mxu0 0.0
    %72 = vmatprep.subr.mxu0 0.0
    %73 = vmatpush1.msra.mxu0 0.0
    %74 = vmatprep.subr.mxu0 0.0
    %75 = vmatpush1.msra.mxu0 0.0
    %76 = vmatprep.subr.mxu0 0.0
    %77 = vmatpush1.msra.mxu0 0.0
    %78 = vmatprep.subr.mxu0 0.0
    %79 = vmatpush1.msra.mxu0 0.0
    %80 = vmatprep.subr.mxu0 0.0
    %81 = vmatpush1.msra.mxu0 0.0
    %82 = vmatprep.subr.mxu0 0.0
    %83 = vmatpush1.msra.mxu0 0.0
    %84 = vmatprep.subr.mxu0 0.0
    %85 = vmatpush1.msra.mxu0 0.0
    %86 = vmatprep.subr.mxu0 0.0
    %87 = vmatpush1.msra.mxu0 0.0
    %88 = vmatprep.subr.mxu0 0.0
    %89 = vmatpush1.msra.mxu0 0.0
    %90 = vmatprep.subr.mxu0 0.0
    %91 = vmatpush1.msra.mxu0 %v50
    %92 = vmatprep.subr.mxu0 0.0
    %93 = vmatpush1.msra.mxu0 %v49
    %94 = vmatprep.subr.mxu0 0.0
    %95 = vmatpush2.msra.mxu0 0.0
    %96 = vmatprep.subr.mxu0 0.0
    %97 = vmatpush2.msra.mxu0 0.0
    %98 = vmatprep.subr.mxu0 0.0
    %99 = vmatpush2.msra.mxu0 0.0
    %100 = vmatprep.subr.mxu0 0.0
    %101 = vmatpush2.msra.mxu0 0.0
    %102 = vmatprep.subr.mxu0 0.0
    %103 = vmatpush2.msra.mxu0 0.0
    %104 = vmatprep.subr.mxu0 0.0
    %105 = vmatpush2.msra.mxu0 0.0
    %106 = vmatprep.subr.mxu0 0.0
    %107 = vmatpush2.msra.mxu0 0.0
    %108 = vmatprep.subr.mxu0 0.0
    %109 = vmatpush2.msra.mxu0 0.0
    %110 = vmatprep.subr.mxu0 0.0
    %111 = vmatpush2.msra.mxu0 0.0
    %112 = vmatprep.subr.mxu0 0.0
    %113 = vmatpush2.msra.mxu0 0.0
    %114 = vmatprep.subr.mxu0 0.0
    %115 = vmatpush2.msra.mxu0 0.0
    %116 = vmatprep.subr.mxu0 0.0
    %117 = vmatpush2.msra.mxu0 0.0
    %118 = vmatprep.subr.mxu0 0.0
    %119 = vmatpush2.msra.mxu0 0.0
    %120 = vmatprep.subr.mxu0 0.0
    %121 = vmatpush2.msra.mxu0 0.0
    %122 = vmatprep.subr.mxu0 0.0
    %123 = vmatpush2.msra.mxu0 0.0
    %124 = vmatprep.subr.mxu0 0.0
    %125 = vmatpush2.msra.mxu0 0.0
    %126 = vmatprep.mubr.f32.mxu0 0.0
    %127 = vmatmul.mubr.f32.gmra.mxu0 %v60
    %v128 = vpop.f32.mrf.mxu0
    %v129 = vadd.f32 %v56, %v128
    %v130 = vpop.f32.mrf.mxu0
    %131 = vdwg.mxu0
    %vm132 = vcmask 517120
    %133 = vst.msk [vmem:[#allocation7] sm:$0x3] %vm132, %v129
    // Predicated region
    $region22: #{tpu_custom_call.1} parent=1 // pred_check
      _
    $region23: #{tpu_custom_call.1} parent=1 // pred_check_branch
      %135 = sbr.rel (0) target = $region25
    $region24: #{tpu_custom_call.1} parent=1 // pred_region
      %s137 = ssub.s32 32, 32
      %138 = vsyncadd [#allocation4], %s137
      %s140 = sshll.u32 [#allocation7], 4
      %s141 = int_to_ptr.vmem [resolvable:$true] %s140
      %143 = dma.vmem_to_hbm [thread:$0]  %s141, 32, %s3, [#allocation4]
    $region25: #{tpu_custom_call.1} parent=1 // pred_fallthru
      _
    // Predicated region
    $region26: #{tpu_custom_call.1} parent=1 // pred_check
      _
    $region27: #{tpu_custom_call.1} parent=1 // pred_check_branch
      %145 = sbr.rel (0) target = $region29
    $region28: #{tpu_custom_call.1} parent=1 // pred_region
      %146 = dma.done [#allocation4], 32
    $region29: #{tpu_custom_call.1} parent=1 // pred_fallthru
      _
    %147 = vsyncpa [#allocation3], 1
    %148 = vsyncpa [#allocation6], 1
    %149 = vsyncpa [#allocation4], 1

</llo_original>
